<compile_context>
chip_gen: v6e
topology: v6e:2x2x1
jax: 0.10.0
libtpu: 0.0.40
codegen_flags: <defaults>
</compile_context>

<pallas_src>
import functools

import jax
import jax.numpy as jnp
from jax.experimental import pallas as pl
from jax.experimental.pallas import tpu as pltpu


def gin_conv2d_kernel(eps_ref, x_ref, idx_ref, w_ref, b_ref, o_ref, *,
                      num_neighbors, conv_first):
    # eps_ref: (1,)        SMEM f32
    # x_ref:   (Cin,  L)   VMEM f32   (L = batch_block*N, lane-dense batch packing)
    # idx_ref: (K,    L)   VMEM int32 (block-offset neighbor ids; -1 => no edge)
    # w_ref:   (Cout, Cin) VMEM f32   (1x1 conv weight)
    # b_ref:   (Cout, 1)   VMEM f32
    # o_ref:   (Cout, L)   VMEM f32
    l = x_ref.shape[-1]
    eps1 = 1.0 + eps_ref[0]

    # Block-diagonal neighbor-count matrix for the whole packed batch block:
    #   a[m, v] = #{k : idx[k, v] == m}
    # Each index row is sublane-broadcast against a dim-0 iota (cheap), so the
    # aggregation matmul below is natively oriented (no transposed RHS).
    row = jax.lax.broadcasted_iota(jnp.int32, (l, l), 0)     # row[m, v] = m
    idx = idx_ref[...]
    a = jnp.zeros((l, l), jnp.int32)
    for k in range(num_neighbors):                            # K is small & static
        a = a + (idx[k:k + 1, :] == row).astype(jnp.int32)
    a = a.astype(jnp.float32)                                 # cast once; counts exact

    if conv_first:
        # Cout < Cin: shrink channels first, aggregate the smaller tensor.
        y = jnp.dot(w_ref[...], x_ref[...], preferred_element_type=jnp.float32)
        h = eps1 * y + jnp.dot(y, a, preferred_element_type=jnp.float32)
    else:
        xj = jnp.dot(x_ref[...], a, preferred_element_type=jnp.float32)
        h = jnp.dot(w_ref[...], eps1 * x_ref[...] + xj,
                    preferred_element_type=jnp.float32)
    o_ref[...] = jnp.maximum(h + b_ref[...], 0.0).astype(o_ref.dtype)


def _pick_batch_block(b_total, n, lane_target=128, min_steps=2):
    """Largest divisor of B whose packed lane width fits lane_target, while
    keeping at least `min_steps` grid steps when possible (pipelining / v7x)."""
    divs = [d for d in range(1, b_total + 1) if b_total % d == 0]
    fits = [d for d in divs if d * n <= lane_target] or [1]
    pipelined = [d for d in fits if b_total // d >= min_steps]
    return max(pipelined) if pipelined else max(fits)


def gin_conv2d(x_nchw, edge_index, weight, bias, eps, *, lane_target=128):
    """x_nchw: (B, Cin, N, 1) f32; edge_index: (2, B, N, K) int; weight: (Cout, Cin);
       bias: (Cout,); eps: scalar. Returns (B, Cout, N, 1) f32."""
    b_total, cin, n, w_dim = x_nchw.shape
    assert w_dim == 1
    cout = weight.shape[0]
    k = edge_index.shape[-1]

    bblk = _pick_batch_block(b_total, n, lane_target=lane_target)
    num_steps = b_total // bblk
    l = bblk * n

    # ---- pack to lane-dense, block-diagonal layout (small mem-bound reshapes) ----
    x_cf = x_nchw[..., 0].astype(jnp.float32)                       # (B, Cin, N)
    x_packed = (x_cf.reshape(num_steps, bblk, cin, n)
                .transpose(0, 2, 1, 3)
                .reshape(num_steps, cin, l))                        # (S, Cin, L)

    idx = edge_index[0].astype(jnp.int32)                           # (B, N, K)
    idx_t = jnp.swapaxes(idx, 1, 2)                                 # (B, K, N) lane-dense
    idx_p = (idx_t.reshape(num_steps, bblk, k, n)
             .transpose(0, 2, 1, 3)
             .reshape(num_steps, k, l))                             # (S, K, L)
    off = (jnp.arange(l, dtype=jnp.int32) // n) * n                 # per-batch lane offset
    in_range = (idx_p >= 0) & (idx_p < n)
    # Invalid neighbors -> -1: never match any row, never alias another batch.
    idx_packed = jnp.where(in_range, idx_p + off[None, None, :], -1)

    w = weight.astype(jnp.float32)                                  # (Cout, Cin)
    bias2 = bias.reshape(cout, 1).astype(jnp.float32)               # (Cout, 1)
    eps_arr = jnp.asarray(eps, dtype=jnp.float32).reshape(1)

    conv_first = cout < cin

    flops_step = 2 * l * l * (cout if conv_first else cin) + 2 * cout * cin * l
    cost = pl.CostEstimate(
        flops=num_steps * flops_step,
        transcendentals=0,
        bytes_accessed=4 * (x_packed.size + idx_packed.size + w.size
                            + bias2.size + num_steps * cout * l),
    )

    # Explicit VMEM budget: double-buffered x/idx/out blocks + A/h temporaries.
    block_bytes = 4 * (2 * cin * l + 2 * k * l + 2 * cout * l
                       + l * l + cin * l + cout * l)
    vmem_limit = int(min(max(4 * block_bytes + (8 << 20), 16 << 20), 64 << 20))

    kern = functools.partial(gin_conv2d_kernel, num_neighbors=k,
                             conv_first=conv_first)

    out_packed = pl.pallas_call(
        kern,
        out_shape=jax.ShapeDtypeStruct((num_steps, cout, l), jnp.float32),
        grid=(num_steps,),
        in_specs=[
            pl.BlockSpec(memory_space=pltpu.MemorySpace.SMEM),       # eps
            pl.BlockSpec((None, cin, l), lambda i: (i, 0, 0)),       # x (packed)
            pl.BlockSpec((None, k, l), lambda i: (i, 0, 0)),         # idx (packed)
            pl.BlockSpec((cout, cin), lambda i: (0, 0)),             # W
            pl.BlockSpec((cout, 1), lambda i: (0, 0)),               # bias
        ],
        out_specs=pl.BlockSpec((None, cout, l), lambda i: (i, 0, 0)),
        compiler_params=pltpu.CompilerParams(
            dimension_semantics=("parallel",),
            vmem_limit_bytes=vmem_limit),
        cost_estimate=cost,
    )(eps_arr, x_packed, idx_packed, w, bias2)

    out = (out_packed.reshape(num_steps, cout, bblk, n)
           .transpose(0, 2, 1, 3)
           .reshape(b_total, cout, n))
    return out[..., None]                                            # (B, Cout, N, 1)


def gin_conv2d_reference(x_nchw, edge_index, weight, bias, eps):
    """Pure-JAX reference mirroring the PyTorch forward."""
    idx = edge_index[0]                                     # (B, N, K)
    x_sq = x_nchw[..., 0]                                   # (B, C, N)
    x_j = jax.vmap(lambda xb, ib: xb[:, ib])(x_sq, idx)     # (B, C, N, K)
    x_j_sum = jnp.sum(x_j, axis=-1, keepdims=True)          # (B, C, N, 1)
    h = (1.0 + eps) * x_nchw + x_j_sum
    out = jnp.einsum('oc,bcnw->bonw', weight, h) + bias[None, :, None, None]
    return jnp.maximum(out, 0.0)


if __name__ == "__main__":
    B, C_IN, C_OUT, N, K = 16, 16, 32, 16, 8

    key = jax.random.PRNGKey(0)
    kx, ke, kw, kb = jax.random.split(key, 4)

    # Inputs (PyTorch NCHW convention: (B, C, N, 1); edge_index: (2, B, N, K))
    x = jax.random.normal(kx, (B, C_IN, N, 1), dtype=jnp.float32)
    edge_index = jax.random.randint(ke, (2, B, N, K), 0, N, dtype=jnp.int32)

    # Parameters (shapes from GINConv2d.__init__):
    #   BasicConv -> Conv2d(C_IN, C_OUT, 1, bias=True), act='relu', norm=None
    #   eps -> scalar learnable parameter (eps_init = 0.0; exercised at 0.1 here)
    weight = 0.1 * jax.random.normal(kw, (C_OUT, C_IN), dtype=jnp.float32)
    bias = 0.1 * jax.random.normal(kb, (C_OUT,), dtype=jnp.float32)
    eps = 0.1

    out = jax.block_until_ready(gin_conv2d(x, edge_index, weight, bias, eps))
    ref = gin_conv2d_reference(x, edge_index, weight, bias, eps)

    assert out.shape == (B, C_OUT, N, 1), out.shape
    if not jnp.allclose(out, ref, atol=1e-4, rtol=1e-4):
        raise AssertionError("Pallas kernel output mismatch vs reference")

    print("KERNEL_OK")
</pallas_src>

<mosaic_0001>
module attributes {stable_mosaic.version = 11 : i64} {
  func.func @gin_conv2d_kernel(%arg0: i32, %arg1: memref<1xf32, #tpu.memory_space<smem>>, %arg2: memref<1x16x128xf32, #tpu.memory_space<vmem>>, %arg3: memref<1x8x128xi32, #tpu.memory_space<vmem>>, %arg4: memref<32x16xf32, #tpu.memory_space<vmem>>, %arg5: memref<32x1xf32, #tpu.memory_space<vmem>>, %arg6: memref<1x32x128xf32, #tpu.memory_space<vmem>>) attributes {dimension_semantics = [#tpu.dimension_semantics<parallel>], iteration_bounds = array<i64: 2>, scalar_prefetch = 0 : i64, scratch_operands = 0 : i64, tpu.core_type = #tpu.core_type<tc>, window_params = [{transform_indices = @transform_0, window_bounds = array<i64: 1>}, {transform_indices = @transform_1, window_bounds = array<i64: 1, 16, 128>}, {transform_indices = @transform_2, window_bounds = array<i64: 1, 8, 128>}, {pipeline_mode = #tpu.pipeline_mode<synchronous>, transform_indices = @transform_3, window_bounds = array<i64: 32, 16>}, {pipeline_mode = #tpu.pipeline_mode<synchronous>, transform_indices = @transform_4, window_bounds = array<i64: 32, 1>}, {transform_indices = @transform_5, window_bounds = array<i64: 1, 32, 128>}]} {
    %c0 = arith.constant 0 : index
    %0 = memref.load %arg1[%c0] : memref<1xf32, #tpu.memory_space<smem>>
    %cst = arith.constant 1.000000e+00 : f32
    %1 = arith.addf %cst, %0 : f32
    %2 = tpu.iota {dimensions = array<i32: 0>} : vector<128x128xi32>
    %c0_0 = arith.constant 0 : index
    %c0_1 = arith.constant 0 : index
    %c0_2 = arith.constant 0 : index
    %3 = vector.load %arg3[%c0_0, %c0_1, %c0_2] : memref<1x8x128xi32, #tpu.memory_space<vmem>>, vector<1x8x128xi32>
    %4 = vector.shape_cast %3 : vector<1x8x128xi32> to vector<8x128xi32>
    %c0_i32 = arith.constant 0 : i32
    %5 = vector.broadcast %c0_i32 : i32 to vector<128x128xi32>
    %6 = vector.extract_strided_slice %4 {offsets = [0, 0], sizes = [1, 128], strides = [1, 1]} : vector<8x128xi32> to vector<1x128xi32>
    %7 = vector.broadcast %6 : vector<1x128xi32> to vector<128x128xi32>
    %8 = arith.cmpi eq, %7, %2 : vector<128x128xi32>
    %9 = arith.extui %8 : vector<128x128xi1> to vector<128x128xi32>
    %10 = arith.addi %5, %9 : vector<128x128xi32>
    %11 = vector.extract_strided_slice %4 {offsets = [1, 0], sizes = [1, 128], strides = [1, 1]} : vector<8x128xi32> to vector<1x128xi32>
    %12 = vector.broadcast %11 : vector<1x128xi32> to vector<128x128xi32>
    %13 = arith.cmpi eq, %12, %2 : vector<128x128xi32>
    %14 = arith.extui %13 : vector<128x128xi1> to vector<128x128xi32>
    %15 = arith.addi %10, %14 : vector<128x128xi32>
    %16 = vector.extract_strided_slice %4 {offsets = [2, 0], sizes = [1, 128], strides = [1, 1]} : vector<8x128xi32> to vector<1x128xi32>
    %17 = vector.broadcast %16 : vector<1x128xi32> to vector<128x128xi32>
    %18 = arith.cmpi eq, %17, %2 : vector<128x128xi32>
    %19 = arith.extui %18 : vector<128x128xi1> to vector<128x128xi32>
    %20 = arith.addi %15, %19 : vector<128x128xi32>
    %21 = vector.extract_strided_slice %4 {offsets = [3, 0], sizes = [1, 128], strides = [1, 1]} : vector<8x128xi32> to vector<1x128xi32>
    %22 = vector.broadcast %21 : vector<1x128xi32> to vector<128x128xi32>
    %23 = arith.cmpi eq, %22, %2 : vector<128x128xi32>
    %24 = arith.extui %23 : vector<128x128xi1> to vector<128x128xi32>
    %25 = arith.addi %20, %24 : vector<128x128xi32>
    %26 = vector.extract_strided_slice %4 {offsets = [4, 0], sizes = [1, 128], strides = [1, 1]} : vector<8x128xi32> to vector<1x128xi32>
    %27 = vector.broadcast %26 : vector<1x128xi32> to vector<128x128xi32>
    %28 = arith.cmpi eq, %27, %2 : vector<128x128xi32>
    %29 = arith.extui %28 : vector<128x128xi1> to vector<128x128xi32>
    %30 = arith.addi %25, %29 : vector<128x128xi32>
    %31 = vector.extract_strided_slice %4 {offsets = [5, 0], sizes = [1, 128], strides = [1, 1]} : vector<8x128xi32> to vector<1x128xi32>
    %32 = vector.broadcast %31 : vector<1x128xi32> to vector<128x128xi32>
    %33 = arith.cmpi eq, %32, %2 : vector<128x128xi32>
    %34 = arith.extui %33 : vector<128x128xi1> to vector<128x128xi32>
    %35 = arith.addi %30, %34 : vector<128x128xi32>
    %36 = vector.extract_strided_slice %4 {offsets = [6, 0], sizes = [1, 128], strides = [1, 1]} : vector<8x128xi32> to vector<1x128xi32>
    %37 = vector.broadcast %36 : vector<1x128xi32> to vector<128x128xi32>
    %38 = arith.cmpi eq, %37, %2 : vector<128x128xi32>
    %39 = arith.extui %38 : vector<128x128xi1> to vector<128x128xi32>
    %40 = arith.addi %35, %39 : vector<128x128xi32>
    %41 = vector.extract_strided_slice %4 {offsets = [7, 0], sizes = [1, 128], strides = [1, 1]} : vector<8x128xi32> to vector<1x128xi32>
    %42 = vector.broadcast %41 : vector<1x128xi32> to vector<128x128xi32>
    %43 = arith.cmpi eq, %42, %2 : vector<128x128xi32>
    %44 = arith.extui %43 : vector<128x128xi1> to vector<128x128xi32>
    %45 = arith.addi %40, %44 : vector<128x128xi32>
    %46 = arith.sitofp %45 : vector<128x128xi32> to vector<128x128xf32>
    %c0_3 = arith.constant 0 : index
    %c0_4 = arith.constant 0 : index
    %c0_5 = arith.constant 0 : index
    %47 = vector.load %arg2[%c0_3, %c0_4, %c0_5] : memref<1x16x128xf32, #tpu.memory_space<vmem>>, vector<1x16x128xf32>
    %48 = vector.shape_cast %47 : vector<1x16x128xf32> to vector<16x128xf32>
    %cst_6 = arith.constant dense<0.000000e+00> : vector<16x128xf32>
    %49 = tpu.matmul %48, %46, %cst_6 {dimension_numbers = #tpu.dot_dimension_numbers<[1], [0], [0], [1], [0, 0, 1, 1], [], []>} : vector<16x128xf32>, vector<128x128xf32>, vector<16x128xf32> -> vector<16x128xf32>
    %c0_7 = arith.constant 0 : index
    %c0_8 = arith.constant 0 : index
    %50 = vector.load %arg4[%c0_7, %c0_8] : memref<32x16xf32, #tpu.memory_space<vmem>>, vector<32x16xf32>
    %c0_9 = arith.constant 0 : index
    %c0_10 = arith.constant 0 : index
    %c0_11 = arith.constant 0 : index
    %51 = vector.load %arg2[%c0_9, %c0_10, %c0_11] : memref<1x16x128xf32, #tpu.memory_space<vmem>>, vector<1x16x128xf32>
    %52 = vector.shape_cast %51 : vector<1x16x128xf32> to vector<16x128xf32>
    %53 = vector.broadcast %1 : f32 to vector<16x128xf32>
    %54 = arith.mulf %53, %52 : vector<16x128xf32>
    %55 = arith.addf %54, %49 : vector<16x128xf32>
    %cst_12 = arith.constant dense<0.000000e+00> : vector<32x128xf32>
    %56 = tpu.matmul %50, %55, %cst_12 {dimension_numbers = #tpu.dot_dimension_numbers<[1], [0], [0], [1], [0, 0, 1, 1], [], []>} : vector<32x16xf32>, vector<16x128xf32>, vector<32x128xf32> -> vector<32x128xf32>
    %c0_13 = arith.constant 0 : index
    %c0_14 = arith.constant 0 : index
    %57 = vector.load %arg5[%c0_13, %c0_14] : memref<32x1xf32, #tpu.memory_space<vmem>>, vector<32x1xf32>
    %58 = vector.broadcast %57 : vector<32x1xf32> to vector<32x128xf32>
    %59 = arith.addf %56, %58 : vector<32x128xf32>
    %cst_15 = arith.constant 0.000000e+00 : f32
    %60 = vector.broadcast %cst_15 : f32 to vector<32x128xf32>
    %61 = arith.maximumf %59, %60 : vector<32x128xf32>
    %c0_16 = arith.constant 0 : index
    %c0_17 = arith.constant 0 : index
    %c0_18 = arith.constant 0 : index
    %62 = vector.load %arg6[%c0_16, %c0_17, %c0_18] : memref<1x32x128xf32, #tpu.memory_space<vmem>>, vector<1x32x128xf32>
    %63 = vector.shape_cast %62 : vector<1x32x128xf32> to vector<32x128xf32>
    %64 = vector.shape_cast %61 : vector<32x128xf32> to vector<1x32x128xf32>
    tpu.vector_store %arg6[%c0_16, %c0_17, %c0_18], %64 {strides = array<i32>} : memref<1x32x128xf32, #tpu.memory_space<vmem>>, vector<1x32x128xf32>,
    return
  }
  func.func @transform_0(%arg0: i32) -> i32 {
    %c0_i32 = arith.constant 0 : i32
    %c0_i32_0 = arith.constant 0 : i32
    return %c0_i32 : i32
  }
  func.func @transform_1(%arg0: i32) -> (i32, i32, i32) {
    %c0_i32 = arith.constant 0 : i32
    %c0_i32_0 = arith.constant 0 : i32
    %c0_i32_1 = arith.constant 0 : i32
    return %arg0, %c0_i32, %c0_i32_0 : i32, i32, i32
  }
  func.func @transform_2(%arg0: i32) -> (i32, i32, i32) {
    %c0_i32 = arith.constant 0 : i32
    %c0_i32_0 = arith.constant 0 : i32
    %c0_i32_1 = arith.constant 0 : i32
    return %arg0, %c0_i32, %c0_i32_0 : i32, i32, i32
  }
  func.func @transform_3(%arg0: i32) -> (i32, i32) {
    %c0_i32 = arith.constant 0 : i32
    %c0_i32_0 = arith.constant 0 : i32
    %c0_i32_1 = arith.constant 0 : i32
    return %c0_i32, %c0_i32_0 : i32, i32
  }
  func.func @transform_4(%arg0: i32) -> (i32, i32) {
    %c0_i32 = arith.constant 0 : i32
    %c0_i32_0 = arith.constant 0 : i32
    %c0_i32_1 = arith.constant 0 : i32
    return %c0_i32, %c0_i32_0 : i32, i32
  }
  func.func @transform_5(%arg0: i32) -> (i32, i32, i32) {
    %c0_i32 = arith.constant 0 : i32
    %c0_i32_0 = arith.constant 0 : i32
    %c0_i32_1 = arith.constant 0 : i32
    return %arg0, %c0_i32, %c0_i32_0 : i32, i32, i32
  }
}

</mosaic_0001>

<llo_original>
// kernel: tpu_custom_call.1
$region0: #{tpu_custom_call.1}
  #allocation0 [shape = 'u32[]', space=smem, size = 0x4, offset = 0x4, fixed_abs, tag = 'smem constant byte address 0x4 - core index']
  #allocation1 [shape = 'u32[144,128]{1,0:T(1,128)}', space=vmem, size = 0x12000, scoped, tag = 'internal scratch']
  #allocation2 [shape = 'f32[1]{0:T(128)S(6)}', space=smem, size = 0x200, scoped, tag = 'scoped memory for tpu_custom_call.1']
  %s0 = inlined_call_operand.<no memory space> [shape: f32[1], index: 0, kind: input, shape index: {}]
  %s1 = inlined_call_operand.vmem [shape: f32[2,16,128], index: 1, kind: input, shape index: {}]
  %s2 = inlined_call_operand.vmem [shape: s32[2,8,128], index: 2, kind: input, shape index: {}]
  %s3 = inlined_call_operand.vmem [shape: f32[32,16], index: 3, kind: input, shape index: {}]
  %s4 = inlined_call_operand.vmem [shape: f32[32,1], index: 4, kind: input, shape index: {}]
  %s5 = inlined_call_operand.hbm [shape: f32[2,32,128], index: 5, kind: output, shape index: {}]
  %s6 = sld [smem:[#allocation0]]
  $region53: #{tpu_custom_call.1} parent=0
    _
  %s8 = ssub.s32 1, %s6
  %s9 = scalar_select 0, %s8, %s6
  %10 = sst [smem:[#allocation2]] %s0
  $region1: #{tpu_custom_call.1} parent=0
    #allocation3 [shape = 'u8[32768]{0}', space=vmem, size = 0x8000, scoped, tag = 'output window, operand 0']
    #allocation4 [shape = 's32[2]{0}', space=sflag, size = 0x8, scoped, tag = 'scoped memory for tpu_custom_call.1']
    %11 = vsyncpa [#allocation4], 0
    %s12 = scalar_lea.sflag [#allocation4], 1
    %13 = vsyncpa %s12, 0
    loop: start=0, step=1, limit=4
    $region2: #{tpu_custom_call.1} parent=1 // loop_pre_header
      _
    $region3: #{tpu_custom_call.1} parent=1 // loop_header
      %s15 = sphi 0, %s19
      %p16 = scmp.ge.s32.totalorder %s15, 4
      %s23 = sphi 0, %s23
      %s25 = sphi 0, %s23
      %s26 = sphi 0, %s25
      %s40 = sphi 0, %s26
      %s46 = sphi 0, %s48
      %s49 = sphi 0, %s46
      %s50 = sphi 0, %s49
      %s66 = sphi 0, %s50
      %s72 = sphi 0, %s74
      %s75 = sphi 0, %s72
      %s76 = sphi 0, %s75
      %s92 = sphi 0, %s76
      %s96 = sphi 0, %s96
      %s98 = sphi 0, %s96
      %s99 = sphi 0, %s98
      %s113 = sphi 0, %s99
      %s117 = sphi 0, %s117
      %s119 = sphi 0, %s117
      %s120 = sphi 0, %s119
      %s134 = sphi 0, %s120
      %s140 = sphi 0, %s142
      %s143 = sphi 0, %s140
      %s144 = sphi 0, %s143
      %s160 = sphi 0, %s144
    $region4: #{tpu_custom_call.1} parent=1 // loop_header_branch
      %18 = sbr.rel (%p16) target = $region8
    $region5: #{tpu_custom_call.1} parent=1 // loop_body
      %s20 = ssub.s32 %s15, 1
      %s21 = ssub.s32 %s15, 2
      %s22 = sadd.s32 %s15, 1
      %s24 = sadd.s32 %s23, 1
      %p27 = scmp.eq.s32.totalorder %s15, 1
      %p28 = scmp.ne.s32.totalorder %s23, %s25
      %p29 = scmp.eq.s32.totalorder %s15, 0
      %p30 = por %p28, %p29
      %p31 = scmp.ne.s32.totalorder %s23, %s25
      %p32 = scmp.eq.s32.totalorder %s20, 1
      %p33 = por %p31, %p32
      %p34 = scmp.ne.s32.totalorder %s25, %s26
      %p35 = scmp.eq.s32.totalorder %s20, 0
      %p36 = por %p34, %p35
      %p37 = scmp.ne.s32.totalorder %s25, %s26
      %p38 = scmp.eq.s32.totalorder %s21, 1
      %p39 = por %p37, %p38
      %p41 = scmp.ne.s32.totalorder %s26, %s40
      %p42 = scmp.eq.s32.totalorder %s21, 0
      %p43 = por %p41, %p42
      %s44 = ssub.s32 %s15, %s22
      %p45 = scmp.eq.s32.totalorder %s44, 0
      %s47 = sadd.s32 %s46, 1
      %s48 = scalar_select %p45, %s46, %s47
      %p51 = pneg %p45
      %p52 = scmp.eq.s32.totalorder %s15, 1
      %p53 = por %p51, %p52
      %p54 = scmp.ne.s32.totalorder %s46, %s49
      %p55 = scmp.eq.s32.totalorder %s15, 0
      %p56 = por %p54, %p55
      %p57 = scmp.ne.s32.totalorder %s46, %s49
      %p58 = scmp.eq.s32.totalorder %s20, 1
      %p59 = por %p57, %p58
      %p60 = scmp.ne.s32.totalorder %s49, %s50
      %p61 = scmp.eq.s32.totalorder %s20, 0
      %p62 = por %p60, %p61
      %p63 = scmp.ne.s32.totalorder %s49, %s50
      %p64 = scmp.eq.s32.totalorder %s21, 1
      %p65 = por %p63, %p64
      %p67 = scmp.ne.s32.totalorder %s50, %s66
      %p68 = scmp.eq.s32.totalorder %s21, 0
      %p69 = por %p67, %p68
      %s70 = ssub.s32 %s15, %s22
      %p71 = scmp.eq.s32.totalorder %s70, 0
      %s73 = sadd.s32 %s72, 1
      %s74 = scalar_select %p71, %s72, %s73
      %p77 = pneg %p71
      %p78 = scmp.eq.s32.totalorder %s15, 1
      %p79 = por %p77, %p78
      %p80 = scmp.ne.s32.totalorder %s72, %s75
      %p81 = scmp.eq.s32.totalorder %s15, 0
      %p82 = por %p80, %p81
      %p83 = scmp.ne.s32.totalorder %s72, %s75
      %p84 = scmp.eq.s32.totalorder %s20, 1
      %p85 = por %p83, %p84
      %p86 = scmp.ne.s32.totalorder %s75, %s76
      %p87 = scmp.eq.s32.totalorder %s20, 0
      %p88 = por %p86, %p87
      %p89 = scmp.ne.s32.totalorder %s75, %s76
      %p90 = scmp.eq.s32.totalorder %s21, 1
      %p91 = por %p89, %p90
      %p93 = scmp.ne.s32.totalorder %s76, %s92
      %p94 = scmp.eq.s32.totalorder %s21, 0
      %p95 = por %p93, %p94
      %s97 = sadd.s32 %s96, 1
      %p100 = scmp.eq.s32.totalorder %s15, 1
      %p101 = scmp.ne.s32.totalorder %s96, %s98
      %p102 = scmp.eq.s32.totalorder %s15, 0
      %p103 = por %p101, %p102
      %p104 = scmp.ne.s32.totalorder %s96, %s98
      %p105 = scmp.eq.s32.totalorder %s20, 1
      %p106 = por %p104, %p105
      %p107 = scmp.ne.s32.totalorder %s98, %s99
      %p108 = scmp.eq.s32.totalorder %s20, 0
      %p109 = por %p107, %p108
      %p110 = scmp.ne.s32.totalorder %s98, %s99
      %p111 = scmp.eq.s32.totalorder %s21, 1
      %p112 = por %p110, %p111
      %p114 = scmp.ne.s32.totalorder %s99, %s113
      %p115 = scmp.eq.s32.totalorder %s21, 0
      %p116 = por %p114, %p115
      %s118 = sadd.s32 %s117, 1
      %p121 = scmp.eq.s32.totalorder %s15, 1
      %p122 = scmp.ne.s32.totalorder %s117, %s119
      %p123 = scmp.eq.s32.totalorder %s15, 0
      %p124 = por %p122, %p123
      %p125 = scmp.ne.s32.totalorder %s117, %s119
      %p126 = scmp.eq.s32.totalorder %s20, 1
      %p127 = por %p125, %p126
      %p128 = scmp.ne.s32.totalorder %s119, %s120
      %p129 = scmp.eq.s32.totalorder %s20, 0
      %p130 = por %p128, %p129
      %p131 = scmp.ne.s32.totalorder %s119, %s120
      %p132 = scmp.eq.s32.totalorder %s21, 1
      %p133 = por %p131, %p132
      %p135 = scmp.ne.s32.totalorder %s120, %s134
      %p136 = scmp.eq.s32.totalorder %s21, 0
      %p137 = por %p135, %p136
      %s138 = ssub.s32 %s15, %s22
      %p139 = scmp.eq.s32.totalorder %s138, 0
      %s141 = sadd.s32 %s140, 1
      %s142 = scalar_select %p139, %s140, %s141
      %p145 = pneg %p139
      %p146 = scmp.eq.s32.totalorder %s15, 1
      %p147 = por %p145, %p146
      %p148 = scmp.ne.s32.totalorder %s140, %s143
      %p149 = scmp.eq.s32.totalorder %s15, 0
      %p150 = por %p148, %p149
      %p151 = scmp.ne.s32.totalorder %s140, %s143
      %p152 = scmp.eq.s32.totalorder %s20, 1
      %p153 = por %p151, %p152
      %p154 = scmp.ne.s32.totalorder %s143, %s144
      %p155 = scmp.eq.s32.totalorder %s20, 0
      %p156 = por %p154, %p155
      %p157 = scmp.ne.s32.totalorder %s143, %s144
      %p158 = scmp.eq.s32.totalorder %s21, 1
      %p159 = por %p157, %p158
      %p161 = scmp.ne.s32.totalorder %s144, %s160
      %p162 = scmp.eq.s32.totalorder %s21, 0
      %p163 = por %p161, %p162
      %p164 = scmp.le.s32.totalorder 1, %s15
      %p165 = scmp.lt.s32.totalorder %s15, 3
      %p166 = pnand %p164, %p165
      %p167 = pneg %p166
      // Predicated region
      $region9: #{tpu_custom_call.1} parent=5 // pred_check
        _
      $region10: #{tpu_custom_call.1} parent=5 // pred_check_branch
        %169 = sbr.rel (%p166) target = $region12
      $region11: #{tpu_custom_call.1} parent=5 // pred_region
        %s170 = ssub.s32 %s15, 1
        // Predicated region
        $region13: #{tpu_custom_call.1} parent=11 // pred_check
          %p171 = pneg %p36
        $region14: #{tpu_custom_call.1} parent=11 // pred_check_branch
          %173 = sbr.rel (%p171) target = $region16
        $region15: #{tpu_custom_call.1} parent=11 // pred_region
          _
        $region16: #{tpu_custom_call.1} parent=11 // pred_fallthru
          _
        // Predicated region
        $region17: #{tpu_custom_call.1} parent=11 // pred_check
          %p174 = pneg %p109
        $region18: #{tpu_custom_call.1} parent=11 // pred_check_branch
          %176 = sbr.rel (%p174) target = $region20
        $region19: #{tpu_custom_call.1} parent=11 // pred_region
          _
        $region20: #{tpu_custom_call.1} parent=11 // pred_fallthru
          _
        // Predicated region
        $region21: #{tpu_custom_call.1} parent=11 // pred_check
          %p177 = pneg %p130
        $region22: #{tpu_custom_call.1} parent=11 // pred_check_branch
          %179 = sbr.rel (%p177) target = $region24
        $region23: #{tpu_custom_call.1} parent=11 // pred_region
          _
        $region24: #{tpu_custom_call.1} parent=11 // pred_fallthru
          _
      $region12: #{tpu_custom_call.1} parent=5 // pred_fallthru
        _
      %p180 = scmp.lt.s32.totalorder %s15, 2
      // Predicated region
      $region25: #{tpu_custom_call.1} parent=5 // pred_check
        %p181 = pneg %p180
      $region26: #{tpu_custom_call.1} parent=5 // pred_check_branch
        %183 = sbr.rel (%p181) target = $region28
      $region27: #{tpu_custom_call.1} parent=5 // pred_region
        // Predicated region
        $region29: #{tpu_custom_call.1} parent=27 // pred_check
          %p184 = pneg %p56
        $region30: #{tpu_custom_call.1} parent=27 // pred_check_branch
          %186 = sbr.rel (%p184) target = $region32
        $region31: #{tpu_custom_call.1} parent=27 // pred_region
          %p187 = scmp.lt.s32.totalorder %s15, 1
          %s188 = scalar_select %p187, %s15, 1
          %s189 = smul.addr %s188, 2
          %s190 = smul.addr %s189, 8
          %s191 = scalar_lea.vmem %s1, %s190
        $region32: #{tpu_custom_call.1} parent=27 // pred_fallthru
          _
        // Predicated region
        $region33: #{tpu_custom_call.1} parent=27 // pred_check
          %p192 = pneg %p82
        $region34: #{tpu_custom_call.1} parent=27 // pred_check_branch
          %194 = sbr.rel (%p192) target = $region36
        $region35: #{tpu_custom_call.1} parent=27 // pred_region
          %p195 = scmp.lt.s32.totalorder %s15, 1
          %s196 = scalar_select %p195, %s15, 1
          %s197 = smul.addr %s196, 8
          %s198 = scalar_lea.vmem %s2, %s197
        $region36: #{tpu_custom_call.1} parent=27 // pred_fallthru
          _
      $region28: #{tpu_custom_call.1} parent=5 // pred_fallthru
        _
      %p199 = scmp.le.s32.totalorder 1, %s15
      %p200 = scmp.lt.s32.totalorder %s15, 3
      %p201 = pnand %p199, %p200
      %p202 = pneg %p201
      // Predicated region
      $region37: #{tpu_custom_call.1} parent=5 // pred_check
        _
      $region38: #{tpu_custom_call.1} parent=5 // pred_check_branch
        %204 = sbr.rel (%p201) target = $region40
      $region39: #{tpu_custom_call.1} parent=5 // pred_region
        %s205 = ssub.s32 %s15, 1
        %p206 = pneg %p36
        %p207 = pneg %p33
        %p208 = scmp.lt.s32.totalorder %s20, 1
        %s209 = scalar_select %p208, %s20, 1
        %s210 = smul.addr %s209, 2
        %s211 = smul.addr %s210, 8
        %s212 = scalar_lea.vmem %s1, %s211
        %p213 = pneg %p62
        %p214 = pneg %p59
        %p215 = scmp.lt.s32.totalorder %s20, 1
        %s216 = scalar_select %p215, %s20, 1
        %s217 = smul.addr %s216, 8
        %s218 = scalar_lea.vmem %s2, %s217
        %p219 = pneg %p88
        %p220 = pneg %p85
        %p221 = pneg %p109
        %p222 = pneg %p106
        %p223 = pneg %p130
        %p224 = pneg %p127
        %p225 = pneg %p156
        %p226 = pneg %p153
        %s227 = sand.u32 %s143, 1
        %s228 = scalar_lea.sflag [#allocation4], %s227
        %s229 = sand.u32 %s143, 1
        %s230 = smul.addr %s229, 32
        %s231 = scalar_lea.vmem [#allocation3], %s230
        %p232 = scmp.lt.s32.totalorder %s20, 1
        %s233 = scalar_select %p232, %s20, 1
        %s234 = smul.addr %s233, 2
        %s235 = smul.addr %s234, 8
        %s236 = scalar_lea.vmem %s1, %s235
        %p237 = scmp.lt.s32.totalorder %s20, 1
        %s238 = scalar_select %p237, %s20, 1
        %s239 = smul.addr %s238, 8
        %s240 = scalar_lea.vmem %s2, %s239
        %s241 = sld [smem:[#allocation2]]
        %s242 = sadd.f32 %s241, 1.0
        %v243 = vlaneseq
        %v244 = vshrl.u32 %v243, 7
        %v245 = vadd.s32 %v244, 8
        %v246 = vadd.s32 %v244, 16
        %v247 = vadd.s32 %v244, 24
        %v248 = vadd.s32 %v244, 32
        %v249 = vadd.s32 %v244, 40
        %v250 = vadd.s32 %v244, 48
        %v251 = vadd.s32 %v244, 56
        %v252 = vadd.s32 %v244, 64
        %v253 = vadd.s32 %v244, 72
        %v254 = vadd.s32 %v244, 80
        %v255 = vadd.s32 %v244, 88
        %v256 = vadd.s32 %v244, 96
        %v257 = vadd.s32 %v244, 104
        %v258 = vadd.s32 %v244, 112
        %v259 = vadd.s32 %v244, 120
        %v260 = vld [vmem:[%s240] sm:$0xff]
        %v261 = vlaneseq
        %v262 = vshrl.u32 %v261, 7
        %v263 = vsub.s32 0, %v262
        %v264 = vrot.slane %v260, %v263
        %vm265 = vcmp.eq.s32.totalorder %v264, %v244
        %vm266 = vcmp.eq.s32.totalorder %v264, %v245
        %vm267 = vcmp.eq.s32.totalorder %v264, %v246
        %vm268 = vcmp.eq.s32.totalorder %v264, %v247
        %vm269 = vcmp.eq.s32.totalorder %v264, %v248
        %vm270 = vcmp.eq.s32.totalorder %v264, %v249
        %vm271 = vcmp.eq.s32.totalorder %v264, %v250
        %vm272 = vcmp.eq.s32.totalorder %v264, %v251
        %vm273 = vcmp.eq.s32.totalorder %v264, %v252
        %vm274 = vcmp.eq.s32.totalorder %v264, %v253
        %vm275 = vcmp.eq.s32.totalorder %v264, %v254
        %vm276 = vcmp.eq.s32.totalorder %v264, %v255
        %vm277 = vcmp.eq.s32.totalorder %v264, %v256
        %vm278 = vcmp.eq.s32.totalorder %v264, %v257
        %vm279 = vcmp.eq.s32.totalorder %v264, %v258
        %vm280 = vcmp.eq.s32.totalorder %v264, %v259
        %v281 = vsel %vm265, 1, 0
        %v282 = vsel %vm266, 1, 0
        %v283 = vsel %vm267, 1, 0
        %v284 = vsel %vm268, 1, 0
        %v285 = vsel %vm269, 1, 0
        %v286 = vsel %vm270, 1, 0
        %v287 = vsel %vm271, 1, 0
        %v288 = vsel %vm272, 1, 0
        %v289 = vsel %vm273, 1, 0
        %v290 = vsel %vm274, 1, 0
        %v291 = vsel %vm275, 1, 0
        %v292 = vsel %vm276, 1, 0
        %v293 = vsel %vm277, 1, 0
        %v294 = vsel %vm278, 1, 0
        %v295 = vsel %vm279, 1, 0
        %v296 = vsel %vm280, 1, 0
        %v297 = vlaneseq
        %v298 = vshrl.u32 %v297, 7
        %v299 = vsub.s32 1, %v298
        %v300 = vrot.slane %v260, %v299
        %vm301 = vcmp.eq.s32.totalorder %v300, %v244
        %vm302 = vcmp.eq.s32.totalorder %v300, %v245
        %vm303 = vcmp.eq.s32.totalorder %v300, %v246
        %vm304 = vcmp.eq.s32.totalorder %v300, %v247
        %vm305 = vcmp.eq.s32.totalorder %v300, %v248
        %vm306 = vcmp.eq.s32.totalorder %v300, %v249
        %vm307 = vcmp.eq.s32.totalorder %v300, %v250
        %vm308 = vcmp.eq.s32.totalorder %v300, %v251
        %vm309 = vcmp.eq.s32.totalorder %v300, %v252
        %vm310 = vcmp.eq.s32.totalorder %v300, %v253
        %vm311 = vcmp.eq.s32.totalorder %v300, %v254
        %vm312 = vcmp.eq.s32.totalorder %v300, %v255
        %vm313 = vcmp.eq.s32.totalorder %v300, %v256
        %vm314 = vcmp.eq.s32.totalorder %v300, %v257
        %vm315 = vcmp.eq.s32.totalorder %v300, %v258
        %vm316 = vcmp.eq.s32.totalorder %v300, %v259
        %v317 = vsel %vm301, 1, 0
        %v318 = vsel %vm302, 1, 0
        %v319 = vsel %vm303, 1, 0
        %v320 = vsel %vm304, 1, 0
        %v321 = vsel %vm305, 1, 0
        %v322 = vsel %vm306, 1, 0
        %v323 = vsel %vm307, 1, 0
        %v324 = vsel %vm308, 1, 0
        %v325 = vsel %vm309, 1, 0
        %v326 = vsel %vm310, 1, 0
        %v327 = vsel %vm311, 1, 0
        %v328 = vsel %vm312, 1, 0
        %v329 = vsel %vm313, 1, 0
        %v330 = vsel %vm314, 1, 0
        %v331 = vsel %vm315, 1, 0
        %v332 = vsel %vm316, 1, 0
        %v333 = vadd.s32 %v281, %v317
        %v334 = vadd.s32 %v282, %v318
        %v335 = vadd.s32 %v283, %v319
        %v336 = vadd.s32 %v284, %v320
        %v337 = vadd.s32 %v285, %v321
        %v338 = vadd.s32 %v286, %v322
        %v339 = vadd.s32 %v287, %v323
        %v340 = vadd.s32 %v288, %v324
        %v341 = vadd.s32 %v289, %v325
        %v342 = vadd.s32 %v290, %v326
        %v343 = vadd.s32 %v291, %v327
        %v344 = vadd.s32 %v292, %v328
        %v345 = vadd.s32 %v293, %v329
        %v346 = vadd.s32 %v294, %v330
        %v347 = vadd.s32 %v295, %v331
        %v348 = vadd.s32 %v296, %v332
        %v349 = vlaneseq
        %v350 = vshrl.u32 %v349, 7
        %v351 = vsub.s32 2, %v350
        %v352 = vrot.slane %v260, %v351
        %vm353 = vcmp.eq.s32.totalorder %v352, %v244
        %vm354 = vcmp.eq.s32.totalorder %v352, %v245
        %vm355 = vcmp.eq.s32.totalorder %v352, %v246
        %vm356 = vcmp.eq.s32.totalorder %v352, %v247
        %vm357 = vcmp.eq.s32.totalorder %v352, %v248
        %vm358 = vcmp.eq.s32.totalorder %v352, %v249
        %vm359 = vcmp.eq.s32.totalorder %v352, %v250
        %vm360 = vcmp.eq.s32.totalorder %v352, %v251
        %vm361 = vcmp.eq.s32.totalorder %v352, %v252
        %vm362 = vcmp.eq.s32.totalorder %v352, %v253
        %vm363 = vcmp.eq.s32.totalorder %v352, %v254
        %vm364 = vcmp.eq.s32.totalorder %v352, %v255
        %vm365 = vcmp.eq.s32.totalorder %v352, %v256
        %vm366 = vcmp.eq.s32.totalorder %v352, %v257
        %vm367 = vcmp.eq.s32.totalorder %v352, %v258
        %vm368 = vcmp.eq.s32.totalorder %v352, %v259
        %v369 = vsel %vm353, 1, 0
        %v370 = vsel %vm354, 1, 0
        %v371 = vsel %vm355, 1, 0
        %v372 = vsel %vm356, 1, 0
        %v373 = vsel %vm357, 1, 0
        %v374 = vsel %vm358, 1, 0
        %v375 = vsel %vm359, 1, 0
        %v376 = vsel %vm360, 1, 0
        %v377 = vsel %vm361, 1, 0
        %v378 = vsel %vm362, 1, 0
        %v379 = vsel %vm363, 1, 0
        %v380 = vsel %vm364, 1, 0
        %v381 = vsel %vm365, 1, 0
        %v382 = vsel %vm366, 1, 0
        %v383 = vsel %vm367, 1, 0
        %v384 = vsel %vm368, 1, 0
        %v385 = vadd.s32 %v333, %v369
        %v386 = vadd.s32 %v334, %v370
        %v387 = vadd.s32 %v335, %v371
        %v388 = vadd.s32 %v336, %v372
        %v389 = vadd.s32 %v337, %v373
        %v390 = vadd.s32 %v338, %v374
        %v391 = vadd.s32 %v339, %v375
        %v392 = vadd.s32 %v340, %v376
        %v393 = vadd.s32 %v341, %v377
        %v394 = vadd.s32 %v342, %v378
        %v395 = vadd.s32 %v343, %v379
        %v396 = vadd.s32 %v344, %v380
        %v397 = vadd.s32 %v345, %v381
        %v398 = vadd.s32 %v346, %v382
        %v399 = vadd.s32 %v347, %v383
        %v400 = vadd.s32 %v348, %v384
        %v401 = vlaneseq
        %v402 = vshrl.u32 %v401, 7
        %v403 = vsub.s32 3, %v402
        %v404 = vrot.slane %v260, %v403
        %vm405 = vcmp.eq.s32.totalorder %v404, %v244
        %vm406 = vcmp.eq.s32.totalorder %v404, %v245
        %vm407 = vcmp.eq.s32.totalorder %v404, %v246
        %vm408 = vcmp.eq.s32.totalorder %v404, %v247
        %vm409 = vcmp.eq.s32.totalorder %v404, %v248
        %vm410 = vcmp.eq.s32.totalorder %v404, %v249
        %vm411 = vcmp.eq.s32.totalorder %v404, %v250
        %vm412 = vcmp.eq.s32.totalorder %v404, %v251
        %vm413 = vcmp.eq.s32.totalorder %v404, %v252
        %vm414 = vcmp.eq.s32.totalorder %v404, %v253
        %vm415 = vcmp.eq.s32.totalorder %v404, %v254
        %vm416 = vcmp.eq.s32.totalorder %v404, %v255
        %vm417 = vcmp.eq.s32.totalorder %v404, %v256
        %vm418 = vcmp.eq.s32.totalorder %v404, %v257
        %vm419 = vcmp.eq.s32.totalorder %v404, %v258
        %vm420 = vcmp.eq.s32.totalorder %v404, %v259
        %v421 = vsel %vm405, 1, 0
        %v422 = vsel %vm406, 1, 0
        %v423 = vsel %vm407, 1, 0
        %v424 = vsel %vm408, 1, 0
        %v425 = vsel %vm409, 1, 0
        %v426 = vsel %vm410, 1, 0
        %v427 = vsel %vm411, 1, 0
        %v428 = vsel %vm412, 1, 0
        %v429 = vsel %vm413, 1, 0
        %v430 = vsel %vm414, 1, 0
        %v431 = vsel %vm415, 1, 0
        %v432 = vsel %vm416, 1, 0
        %v433 = vsel %vm417, 1, 0
        %v434 = vsel %vm418, 1, 0
        %v435 = vsel %vm419, 1, 0
        %v436 = vsel %vm420, 1, 0
        %v437 = vadd.s32 %v385, %v421
        %v438 = vadd.s32 %v386, %v422
        %v439 = vadd.s32 %v387, %v423
        %v440 = vadd.s32 %v388, %v424
        %v441 = vadd.s32 %v389, %v425
        %v442 = vadd.s32 %v390, %v426
        %v443 = vadd.s32 %v391, %v427
        %v444 = vadd.s32 %v392, %v428
        %v445 = vadd.s32 %v393, %v429
        %v446 = vadd.s32 %v394, %v430
        %v447 = vadd.s32 %v395, %v431
        %v448 = vadd.s32 %v396, %v432
        %v449 = vadd.s32 %v397, %v433
        %v450 = vadd.s32 %v398, %v434
        %v451 = vadd.s32 %v399, %v435
        %v452 = vadd.s32 %v400, %v436
        %v453 = vlaneseq
        %v454 = vshrl.u32 %v453, 7
        %v455 = vsub.s32 4, %v454
        %v456 = vrot.slane %v260, %v455
        %vm457 = vcmp.eq.s32.totalorder %v456, %v244
        %vm458 = vcmp.eq.s32.totalorder %v456, %v245
        %vm459 = vcmp.eq.s32.totalorder %v456, %v246
        %vm460 = vcmp.eq.s32.totalorder %v456, %v247
        %vm461 = vcmp.eq.s32.totalorder %v456, %v248
        %vm462 = vcmp.eq.s32.totalorder %v456, %v249
        %vm463 = vcmp.eq.s32.totalorder %v456, %v250
        %vm464 = vcmp.eq.s32.totalorder %v456, %v251
        %vm465 = vcmp.eq.s32.totalorder %v456, %v252
        %vm466 = vcmp.eq.s32.totalorder %v456, %v253
        %vm467 = vcmp.eq.s32.totalorder %v456, %v254
        %vm468 = vcmp.eq.s32.totalorder %v456, %v255
        %vm469 = vcmp.eq.s32.totalorder %v456, %v256
        %vm470 = vcmp.eq.s32.totalorder %v456, %v257
        %vm471 = vcmp.eq.s32.totalorder %v456, %v258
        %vm472 = vcmp.eq.s32.totalorder %v456, %v259
        %v473 = vsel %vm457, 1, 0
        %v474 = vsel %vm458, 1, 0
        %v475 = vsel %vm459, 1, 0
        %v476 = vsel %vm460, 1, 0
        %v477 = vsel %vm461, 1, 0
        %v478 = vsel %vm462, 1, 0
        %v479 = vsel %vm463, 1, 0
        %v480 = vsel %vm464, 1, 0
        %v481 = vsel %vm465, 1, 0
        %v482 = vsel %vm466, 1, 0
        %v483 = vsel %vm467, 1, 0
        %v484 = vsel %vm468, 1, 0
        %v485 = vsel %vm469, 1, 0
        %v486 = vsel %vm470, 1, 0
        %v487 = vsel %vm471, 1, 0
        %v488 = vsel %vm472, 1, 0
        %v489 = vadd.s32 %v437, %v473
        %v490 = vadd.s32 %v438, %v474
        %v491 = vadd.s32 %v439, %v475
        %v492 = vadd.s32 %v440, %v476
        %v493 = vadd.s32 %v441, %v477
        %v494 = vadd.s32 %v442, %v478
        %v495 = vadd.s32 %v443, %v479
        %v496 = vadd.s32 %v444, %v480
        %v497 = vadd.s32 %v445, %v481
        %v498 = vadd.s32 %v446, %v482
        %v499 = vadd.s32 %v447, %v483
        %v500 = vadd.s32 %v448, %v484
        %v501 = vadd.s32 %v449, %v485
        %v502 = vadd.s32 %v450, %v486
        %v503 = vadd.s32 %v451, %v487
        %v504 = vadd.s32 %v452, %v488
        %v505 = vlaneseq
        %v506 = vshrl.u32 %v505, 7
        %v507 = vsub.s32 5, %v506
        %v508 = vrot.slane %v260, %v507
        %vm509 = vcmp.eq.s32.totalorder %v508, %v244
        %vm510 = vcmp.eq.s32.totalorder %v508, %v245
        %vm511 = vcmp.eq.s32.totalorder %v508, %v246
        %vm512 = vcmp.eq.s32.totalorder %v508, %v247
        %vm513 = vcmp.eq.s32.totalorder %v508, %v248
        %vm514 = vcmp.eq.s32.totalorder %v508, %v249
        %vm515 = vcmp.eq.s32.totalorder %v508, %v250
        %vm516 = vcmp.eq.s32.totalorder %v508, %v251
        %vm517 = vcmp.eq.s32.totalorder %v508, %v252
        %vm518 = vcmp.eq.s32.totalorder %v508, %v253
        %vm519 = vcmp.eq.s32.totalorder %v508, %v254
        %vm520 = vcmp.eq.s32.totalorder %v508, %v255
        %vm521 = vcmp.eq.s32.totalorder %v508, %v256
        %vm522 = vcmp.eq.s32.totalorder %v508, %v257
        %vm523 = vcmp.eq.s32.totalorder %v508, %v258
        %vm524 = vcmp.eq.s32.totalorder %v508, %v259
        %v525 = vsel %vm509, 1, 0
        %v526 = vsel %vm510, 1, 0
        %v527 = vsel %vm511, 1, 0
        %v528 = vsel %vm512, 1, 0
        %v529 = vsel %vm513, 1, 0
        %v530 = vsel %vm514, 1, 0
        %v531 = vsel %vm515, 1, 0
        %v532 = vsel %vm516, 1, 0
        %v533 = vsel %vm517, 1, 0
        %v534 = vsel %vm518, 1, 0
        %v535 = vsel %vm519, 1, 0
        %v536 = vsel %vm520, 1, 0
        %v537 = vsel %vm521, 1, 0
        %v538 = vsel %vm522, 1, 0
        %v539 = vsel %vm523, 1, 0
        %v540 = vsel %vm524, 1, 0
        %v541 = vadd.s32 %v489, %v525
        %v542 = vadd.s32 %v490, %v526
        %v543 = vadd.s32 %v491, %v527
        %v544 = vadd.s32 %v492, %v528
        %v545 = vadd.s32 %v493, %v529
        %v546 = vadd.s32 %v494, %v530
        %v547 = vadd.s32 %v495, %v531
        %v548 = vadd.s32 %v496, %v532
        %v549 = vadd.s32 %v497, %v533
        %v550 = vadd.s32 %v498, %v534
        %v551 = vadd.s32 %v499, %v535
        %v552 = vadd.s32 %v500, %v536
        %v553 = vadd.s32 %v501, %v537
        %v554 = vadd.s32 %v502, %v538
        %v555 = vadd.s32 %v503, %v539
        %v556 = vadd.s32 %v504, %v540
        %v557 = vlaneseq
        %v558 = vshrl.u32 %v557, 7
        %v559 = vsub.s32 6, %v558
        %v560 = vrot.slane %v260, %v559
        %vm561 = vcmp.eq.s32.totalorder %v560, %v244
        %vm562 = vcmp.eq.s32.totalorder %v560, %v245
        %vm563 = vcmp.eq.s32.totalorder %v560, %v246
        %vm564 = vcmp.eq.s32.totalorder %v560, %v247
        %vm565 = vcmp.eq.s32.totalorder %v560, %v248
        %vm566 = vcmp.eq.s32.totalorder %v560, %v249
        %vm567 = vcmp.eq.s32.totalorder %v560, %v250
        %vm568 = vcmp.eq.s32.totalorder %v560, %v251
        %vm569 = vcmp.eq.s32.totalorder %v560, %v252
        %vm570 = vcmp.eq.s32.totalorder %v560, %v253
        %vm571 = vcmp.eq.s32.totalorder %v560, %v254
        %vm572 = vcmp.eq.s32.totalorder %v560, %v255
        %vm573 = vcmp.eq.s32.totalorder %v560, %v256
        %vm574 = vcmp.eq.s32.totalorder %v560, %v257
        %vm575 = vcmp.eq.s32.totalorder %v560, %v258
        %vm576 = vcmp.eq.s32.totalorder %v560, %v259
        %v577 = vsel %vm561, 1, 0
        %v578 = vsel %vm562, 1, 0
        %v579 = vsel %vm563, 1, 0
        %v580 = vsel %vm564, 1, 0
        %v581 = vsel %vm565, 1, 0
        %v582 = vsel %vm566, 1, 0
        %v583 = vsel %vm567, 1, 0
        %v584 = vsel %vm568, 1, 0
        %v585 = vsel %vm569, 1, 0
        %v586 = vsel %vm570, 1, 0
        %v587 = vsel %vm571, 1, 0
        %v588 = vsel %vm572, 1, 0
        %v589 = vsel %vm573, 1, 0
        %v590 = vsel %vm574, 1, 0
        %v591 = vsel %vm575, 1, 0
        %v592 = vsel %vm576, 1, 0
        %v593 = vadd.s32 %v541, %v577
        %v594 = vadd.s32 %v542, %v578
        %v595 = vadd.s32 %v543, %v579
        %v596 = vadd.s32 %v544, %v580
        %v597 = vadd.s32 %v545, %v581
        %v598 = vadd.s32 %v546, %v582
        %v599 = vadd.s32 %v547, %v583
        %v600 = vadd.s32 %v548, %v584
        %v601 = vadd.s32 %v549, %v585
        %v602 = vadd.s32 %v550, %v586
        %v603 = vadd.s32 %v551, %v587
        %v604 = vadd.s32 %v552, %v588
        %v605 = vadd.s32 %v553, %v589
        %v606 = vadd.s32 %v554, %v590
        %v607 = vadd.s32 %v555, %v591
        %v608 = vadd.s32 %v556, %v592
        %v609 = vlaneseq
        %v610 = vshrl.u32 %v609, 7
        %v611 = vsub.s32 7, %v610
        %v612 = vrot.slane %v260, %v611
        %vm613 = vcmp.eq.s32.totalorder %v612, %v244
        %vm614 = vcmp.eq.s32.totalorder %v612, %v245
        %vm615 = vcmp.eq.s32.totalorder %v612, %v246
        %vm616 = vcmp.eq.s32.totalorder %v612, %v247
        %vm617 = vcmp.eq.s32.totalorder %v612, %v248
        %vm618 = vcmp.eq.s32.totalorder %v612, %v249
        %vm619 = vcmp.eq.s32.totalorder %v612, %v250
        %vm620 = vcmp.eq.s32.totalorder %v612, %v251
        %vm621 = vcmp.eq.s32.totalorder %v612, %v252
        %vm622 = vcmp.eq.s32.totalorder %v612, %v253
        %vm623 = vcmp.eq.s32.totalorder %v612, %v254
        %vm624 = vcmp.eq.s32.totalorder %v612, %v255
        %vm625 = vcmp.eq.s32.totalorder %v612, %v256
        %vm626 = vcmp.eq.s32.totalorder %v612, %v257
        %vm627 = vcmp.eq.s32.totalorder %v612, %v258
        %vm628 = vcmp.eq.s32.totalorder %v612, %v259
        %v629 = vsel %vm613, 1, 0
        %v630 = vsel %vm614, 1, 0
        %v631 = vsel %vm615, 1, 0
        %v632 = vsel %vm616, 1, 0
        %v633 = vsel %vm617, 1, 0
        %v634 = vsel %vm618, 1, 0
        %v635 = vsel %vm619, 1, 0
        %v636 = vsel %vm620, 1, 0
        %v637 = vsel %vm621, 1, 0
        %v638 = vsel %vm622, 1, 0
        %v639 = vsel %vm623, 1, 0
        %v640 = vsel %vm624, 1, 0
        %v641 = vsel %vm625, 1, 0
        %v642 = vsel %vm626, 1, 0
        %v643 = vsel %vm627, 1, 0
        %v644 = vsel %vm628, 1, 0
        %v645 = vadd.s32 %v593, %v629
        %v646 = vadd.s32 %v594, %v630
        %v647 = vadd.s32 %v595, %v631
        %v648 = vadd.s32 %v596, %v632
        %v649 = vadd.s32 %v597, %v633
        %v650 = vadd.s32 %v598, %v634
        %v651 = vadd.s32 %v599, %v635
        %v652 = vadd.s32 %v600, %v636
        %v653 = vadd.s32 %v601, %v637
        %v654 = vadd.s32 %v602, %v638
        %v655 = vadd.s32 %v603, %v639
        %v656 = vadd.s32 %v604, %v640
        %v657 = vadd.s32 %v605, %v641
        %v658 = vadd.s32 %v606, %v642
        %v659 = vadd.s32 %v607, %v643
        %v660 = vadd.s32 %v608, %v644
        %v661 = vcvt.s32.f32 %v645
        %v662 = vcvt.s32.f32 %v646
        %v663 = vcvt.s32.f32 %v647
        %v664 = vcvt.s32.f32 %v648
        %v665 = vcvt.s32.f32 %v649
        %v666 = vcvt.s32.f32 %v650
        %v667 = vcvt.s32.f32 %v651
        %v668 = vcvt.s32.f32 %v652
        %v669 = vcvt.s32.f32 %v653
        %v670 = vcvt.s32.f32 %v654
        %v671 = vcvt.s32.f32 %v655
        %v672 = vcvt.s32.f32 %v656
        %v673 = vcvt.s32.f32 %v657
        %v674 = vcvt.s32.f32 %v658
        %v675 = vcvt.s32.f32 %v659
        %v676 = vcvt.s32.f32 %v660
        %v677 = vld [vmem:[%s236] sm:$0xff]
        %v678 = vld [vmem:[%s236 + $0x8] sm:$0xff]
        %679 = vmatprep.subr.mxu0 0.0
        %680 = vmatpush1.msra.mxu0 %v676
        %681 = vmatprep.subr.mxu0 0.0
        %682 = vmatpush1.msra.mxu0 %v675
        %683 = vmatprep.subr.mxu0 0.0
        %684 = vmatpush1.msra.mxu0 %v674
        %685 = vmatprep.subr.mxu0 0.0
        %686 = vmatpush1.msra.mxu0 %v673
        %687 = vmatprep.subr.mxu0 0.0
        %688 = vmatpush1.msra.mxu0 %v672
        %689 = vmatprep.subr.mxu0 0.0
        %690 = vmatpush1.msra.mxu0 %v671
        %691 = vmatprep.subr.mxu0 0.0
        %692 = vmatpush1.msra.mxu0 %v670
        %693 = vmatprep.subr.mxu0 0.0
        %694 = vmatpush1.msra.mxu0 %v669
        %695 = vmatprep.subr.mxu0 0.0
        %696 = vmatpush1.msra.mxu0 %v668
        %697 = vmatprep.subr.mxu0 0.0
        %698 = vmatpush1.msra.mxu0 %v667
        %699 = vmatprep.subr.mxu0 0.0
        %700 = vmatpush1.msra.mxu0 %v666
        %701 = vmatprep.subr.mxu0 0.0
        %702 = vmatpush1.msra.mxu0 %v665
        %703 = vmatprep.subr.mxu0 0.0
        %704 = vmatpush1.msra.mxu0 %v664
        %705 = vmatprep.subr.mxu0 0.0
        %706 = vmatpush1.msra.mxu0 %v663
        %707 = vmatprep.subr.mxu0 0.0
        %708 = vmatpush1.msra.mxu0 %v662
        %709 = vmatprep.subr.mxu0 0.0
        %710 = vmatpush1.msra.mxu0 %v661
        %711 = vmatprep.subr.mxu0 0.0
        %712 = vmatpush2.msra.mxu0 0.0
        %713 = vmatprep.subr.mxu0 0.0
        %714 = vmatpush2.msra.mxu0 0.0
        %715 = vmatprep.subr.mxu0 0.0
        %716 = vmatpush2.msra.mxu0 0.0
        %717 = vmatprep.subr.mxu0 0.0
        %718 = vmatpush2.msra.mxu0 0.0
        %719 = vmatprep.subr.mxu0 0.0
        %720 = vmatpush2.msra.mxu0 0.0
        %721 = vmatprep.subr.mxu0 0.0
        %722 = vmatpush2.msra.mxu0 0.0
        %723 = vmatprep.subr.mxu0 0.0
        %724 = vmatpush2.msra.mxu0 0.0
        %725 = vmatprep.subr.mxu0 0.0
        %726 = vmatpush2.msra.mxu0 0.0
        %727 = vmatprep.subr.mxu0 0.0
        %728 = vmatpush2.msra.mxu0 0.0
        %729 = vmatprep.subr.mxu0 0.0
        %730 = vmatpush2.msra.mxu0 0.0
        %731 = vmatprep.subr.mxu0 0.0
        %732 = vmatpush2.msra.mxu0 0.0
        %733 = vmatprep.subr.mxu0 0.0
        %734 = vmatpush2.msra.mxu0 0.0
        %735 = vmatprep.subr.mxu0 0.0
        %736 = vmatpush2.msra.mxu0 0.0
        %737 = vmatprep.subr.mxu0 0.0
        %738 = vmatpush2.msra.mxu0 0.0
        %739 = vmatprep.subr.mxu0 0.0
        %740 = vmatpush2.msra.mxu0 0.0
        %741 = vmatprep.subr.mxu0 0.0
        %742 = vmatpush2.msra.mxu0 0.0
        %743 = vmatprep.mubr.f32.mxu0 0.0
        %744 = vmatmul.mubr.f32.gmra.mxu0 %v677
        %v745 = vpop.f32.mrf.mxu0
        %v746 = vadd.f32 0.0, %v745
        %v747 = vpop.f32.mrf.mxu0
        %748 = vmatprep.mubr.f32.mxu0 0.0
        %749 = vmatmul.mubr.f32.gmra.mxu0 %v678
        %v750 = vpop.f32.mrf.mxu0
        %v751 = vadd.f32 0.0, %v750
        %v752 = vpop.f32.mrf.mxu0
        %753 = vdwg.mxu0
        %v754 = vld [vmem:[%s3] sm:$0xff]
        %v755 = vld [vmem:[%s3 + $0x8] sm:$0xff]
        %v756 = vld [vmem:[%s3 + $0x10] sm:$0xff]
        %v757 = vld [vmem:[%s3 + $0x18] sm:$0xff]
        %v758 = vstv %s242
        %v759 = vmul.f32 %v758, %v677
        %v760 = vmul.f32 %v758, %v678
        %v761 = vadd.f32 %v759, %v746
        %v762 = vadd.f32 %v760, %v751
        %v763 = vld [vmem:[%s4] sm:$0xff]
        %v764 = vld [vmem:[%s4 + $0x8] sm:$0xff]
        %v765 = vld [vmem:[%s4 + $0x10] sm:$0xff]
        %v766 = vld [vmem:[%s4 + $0x18] sm:$0xff]
        %768 = vset.pattern.permute.xlu0 0
        %769 = vperm.xlu0 %768, %v763
        %v770 = vpop.permute.xlu0 %769
        %773 = vset.pattern.permute.xlu0 0
        %774 = vperm.xlu0 %773, %v764
        %v775 = vpop.permute.xlu0 %774
        %778 = vset.pattern.permute.xlu0 0
        %779 = vperm.xlu0 %778, %v765
        %v780 = vpop.permute.xlu0 %779
        %783 = vset.pattern.permute.xlu0 0
        %784 = vperm.xlu0 %783, %v766
        %v785 = vpop.permute.xlu0 %784
        %vm787 = vcmask 130048
        %v789 = vsel %vm787, %v754, 0
        %v792 = vsel %vm787, %v755, 0
        %v795 = vsel %vm787, %v756, 0
        %v798 = vsel %vm787, %v757, 0
        %800 = vmatprep.subr.mxu0 0.0
        %801 = vmatpush1.msra.mxu0 0.0
        %802 = vmatprep.subr.mxu0 0.0
        %803 = vmatpush1.msra.mxu0 0.0
        %804 = vmatprep.subr.mxu0 0.0
        %805 = vmatpush1.msra.mxu0 0.0
        %806 = vmatprep.subr.mxu0 0.0
        %807 = vmatpush1.msra.mxu0 0.0
        %808 = vmatprep.subr.mxu0 0.0
        %809 = vmatpush1.msra.mxu0 0.0
        %810 = vmatprep.subr.mxu0 0.0
        %811 = vmatpush1.msra.mxu0 0.0
        %812 = vmatprep.subr.mxu0 0.0
        %813 = vmatpush1.msra.mxu0 0.0
        %814 = vmatprep.subr.mxu0 0.0
        %815 = vmatpush1.msra.mxu0 0.0
        %816 = vmatprep.subr.mxu0 0.0
        %817 = vmatpush1.msra.mxu0 0.0
        %818 = vmatprep.subr.mxu0 0.0
        %819 = vmatpush1.msra.mxu0 0.0
        %820 = vmatprep.subr.mxu0 0.0
        %821 = vmatpush1.msra.mxu0 0.0
        %822 = vmatprep.subr.mxu0 0.0
        %823 = vmatpush1.msra.mxu0 0.0
        %824 = vmatprep.subr.mxu0 0.0
        %825 = vmatpush1.msra.mxu0 0.0
        %826 = vmatprep.subr.mxu0 0.0
        %827 = vmatpush1.msra.mxu0 0.0
        %828 = vmatprep.subr.mxu0 0.0
        %829 = vmatpush1.msra.mxu0 %v762
        %830 = vmatprep.subr.mxu0 0.0
        %831 = vmatpush1.msra.mxu0 %v761
        %832 = vmatprep.subr.mxu0 0.0
        %833 = vmatpush2.msra.mxu0 0.0
        %834 = vmatprep.subr.mxu0 0.0
        %835 = vmatpush2.msra.mxu0 0.0
        %836 = vmatprep.subr.mxu0 0.0
        %837 = vmatpush2.msra.mxu0 0.0
        %838 = vmatprep.subr.mxu0 0.0
        %839 = vmatpush2.msra.mxu0 0.0
        %840 = vmatprep.subr.mxu0 0.0
        %841 = vmatpush2.msra.mxu0 0.0
        %842 = vmatprep.subr.mxu0 0.0
        %843 = vmatpush2.msra.mxu0 0.0
        %844 = vmatprep.subr.mxu0 0.0
        %845 = vmatpush2.msra.mxu0 0.0
        %846 = vmatprep.subr.mxu0 0.0
        %847 = vmatpush2.msra.mxu0 0.0
        %848 = vmatprep.subr.mxu0 0.0
        %849 = vmatpush2.msra.mxu0 0.0
        %850 = vmatprep.subr.mxu0 0.0
        %851 = vmatpush2.msra.mxu0 0.0
        %852 = vmatprep.subr.mxu0 0.0
        %853 = vmatpush2.msra.mxu0 0.0
        %854 = vmatprep.subr.mxu0 0.0
        %855 = vmatpush2.msra.mxu0 0.0
        %856 = vmatprep.subr.mxu0 0.0
        %857 = vmatpush2.msra.mxu0 0.0
        %858 = vmatprep.subr.mxu0 0.0
        %859 = vmatpush2.msra.mxu0 0.0
        %860 = vmatprep.subr.mxu0 0.0
        %861 = vmatpush2.msra.mxu0 0.0
        %862 = vmatprep.subr.mxu0 0.0
        %863 = vmatpush2.msra.mxu0 0.0
        %864 = vmatprep.mubr.f32.mxu0 0.0
        %865 = vmatmul.mubr.f32.gmra.mxu0 %v789
        %v866 = vpop.f32.mrf.mxu0
        %v867 = vadd.f32 %v770, %v866
        %v868 = vpop.f32.mrf.mxu0
        %869 = vmatprep.mubr.f32.mxu0 0.0
        %870 = vmatmul.mubr.f32.gmra.mxu0 %v792
        %v871 = vpop.f32.mrf.mxu0
        %v872 = vadd.f32 %v775, %v871
        %v873 = vpop.f32.mrf.mxu0
        %874 = vmatprep.mubr.f32.mxu0 0.0
        %875 = vmatmul.mubr.f32.gmra.mxu0 %v795
        %v876 = vpop.f32.mrf.mxu0
        %v877 = vadd.f32 %v780, %v876
        %v878 = vpop.f32.mrf.mxu0
        %879 = vmatprep.mubr.f32.mxu0 0.0
        %880 = vmatmul.mubr.f32.gmra.mxu0 %v798
        %v881 = vpop.f32.mrf.mxu0
        %v882 = vadd.f32 %v785, %v881
        %v883 = vpop.f32.mrf.mxu0
        %884 = vdwg.mxu0
        %v885 = vmax.f32 %v867, 0.0
        %v886 = vmax.f32 %v872, 0.0
        %v887 = vmax.f32 %v877, 0.0
        %v888 = vmax.f32 %v882, 0.0
        %889 = vst [vmem:[%s231] sm:$0xff] %v885
        %890 = vst [vmem:[%s231 + $0x8] sm:$0xff] %v886
        %891 = vst [vmem:[%s231 + $0x10] sm:$0xff] %v887
        %892 = vst [vmem:[%s231 + $0x18] sm:$0xff] %v888
        %s893 = sand.u32 %s143, 1
        %s894 = scalar_lea.sflag [#allocation4], %s893
        %s895 = sand.u32 %s143, 1
        %s896 = smul.addr %s895, 32
        %s897 = scalar_lea.vmem [#allocation3], %s896
        // Predicated region
        $region41: #{tpu_custom_call.1} parent=39 // pred_check
          %p898 = pneg %p153
        $region42: #{tpu_custom_call.1} parent=39 // pred_check_branch
          %900 = sbr.rel (%p898) target = $region44
        $region43: #{tpu_custom_call.1} parent=39 // pred_region
          %s902 = ssub.s32 512, 512
          %903 = vsyncadd %s894, %s902
          %s904 = smul.addr %s20, 4
          %s905 = smul.addr %s904, 128
          %s906 = scalar_lea.hbm %s5, %s905
          %s907 = sshll.u32 %s897, 4
          %s908 = int_to_ptr.vmem [resolvable:$true] %s907
          %913 = dma.vmem_to_hbm [thread:$0]  %s908, 512, %s906, %s894, 128, 128, 8
        $region44: #{tpu_custom_call.1} parent=39 // pred_fallthru
          _
      $region40: #{tpu_custom_call.1} parent=5 // pred_fallthru
        _
      %p914 = scmp.le.s32.totalorder 2, %s15
      // Predicated region
      $region45: #{tpu_custom_call.1} parent=5 // pred_check
        %p915 = pneg %p914
      $region46: #{tpu_custom_call.1} parent=5 // pred_check_branch
        %917 = sbr.rel (%p915) target = $region48
      $region47: #{tpu_custom_call.1} parent=5 // pred_region
        %s918 = ssub.s32 %s15, 2
        // Predicated region
        $region49: #{tpu_custom_call.1} parent=47 // pred_check
          %p919 = pneg %p159
        $region50: #{tpu_custom_call.1} parent=47 // pred_check_branch
          %921 = sbr.rel (%p919) target = $region52
        $region51: #{tpu_custom_call.1} parent=47 // pred_region
          %s922 = sand.u32 %s144, 1
          %s923 = scalar_lea.sflag [#allocation4], %s922
          %s924 = sand.u32 %s144, 1
          %s925 = smul.addr %s924, 32
          %s926 = scalar_lea.vmem [#allocation3], %s925
          %927 = dma.done %s923, 512
        $region52: #{tpu_custom_call.1} parent=47 // pred_fallthru
          _
      $region48: #{tpu_custom_call.1} parent=5 // pred_fallthru
        _
    $region6: #{tpu_custom_call.1} parent=1 // loop_footer
      %s19 = sadd.s32 1, %s15
    $region7: #{tpu_custom_call.1} parent=1 // loop_footer_branch
      %14 = sbr.rel target = $region3
    $region8: #{tpu_custom_call.1} parent=1 // loop_exit
      _
    %928 = vsyncpa [#allocation4], 1
    %s929 = scalar_lea.sflag [#allocation4], 1
    %930 = vsyncpa %s929, 1

</llo_original>
